<compile_context>
chip_gen: v7x
topology: tpu7x:2x2x1
jax: 0.10.0
libtpu: 0.0.40
codegen_flags: <defaults>
</compile_context>

<pallas_src>
import functools

import jax
import jax.numpy as jnp
from jax.experimental import pallas as pl
from jax.experimental.pallas import tpu as pltpu


_MAX_TILE_B = 3072  # 3072*128 rows/step; double-buffered IO ~15.7 MiB (v7x-safe)


def _round_up(x, m):
    return ((x + m - 1) // m) * m


def _mlp_kernel(x_ref, a1_ref, c1_ref, a2_ref, c2_ref, out_ref):
    """Fused 2-layer MLP on one lane-dense batch tile (pure VPU/EUP math).

    x_ref:   (2, TILE_B, 128) VMEM  -- feature-major input slabs
    a1_ref:  (2, 2)           SMEM  -- 0.5 * W1           (out, in)
    c1_ref:  (2,)             SMEM  -- 0.5 * b1
    a2_ref:  (3, 2)           SMEM  -- 0.25 * W2          (out, in)
    c2_ref:  (3,)             SMEM  -- 0.25*W2.sum(1) + 0.5*b2
    out_ref: (3, TILE_B, 128) VMEM  -- feature-major output slabs

    sigmoid(z) = 0.5*tanh(0.5*z) + 0.5 with all constants folded into the
    SMEM params, so only one transcendental per neuron per row is issued.
    """
    x0 = x_ref[0, :, :].astype(jnp.float32)   # (TILE_B, 128) dense slab
    x1 = x_ref[1, :, :].astype(jnp.float32)

    # Hidden layer (tanh form of sigmoid; h_j = 0.5*t_j + 0.5 is folded below).
    t0 = jnp.tanh(a1_ref[0, 0] * x0 + a1_ref[0, 1] * x1 + c1_ref[0])
    t1 = jnp.tanh(a1_ref[1, 0] * x0 + a1_ref[1, 1] * x1 + c1_ref[1])

    # Output layer: full-width, lane-dense stores (one per output unit).
    for k in range(3):
        out_ref[k, :, :] = (
            0.5 * jnp.tanh(a2_ref[k, 0] * t0 + a2_ref[k, 1] * t1 + c2_ref[k]) + 0.5
        ).astype(out_ref.dtype)


@functools.partial(jax.jit, static_argnames=("tile_b",))
def three_layer_perceptron(x, w1, b1, w2, b2, *, tile_b=2048):
    """x: (N, 2); w1: (2, 2) (out,in); b1: (2,); w2: (3, 2); b2: (3,). -> (N, 3) f32."""
    n, f_in = x.shape
    assert f_in == 2, f_in
    f_out = w2.shape[0]

    # ---- fold sigmoid(z) = 0.5*tanh(0.5*z)+0.5 constants into the tiny params ----
    w1f, b1f = w1.astype(jnp.float32), b1.astype(jnp.float32)
    w2f, b2f = w2.astype(jnp.float32), b2.astype(jnp.float32)
    a1 = 0.5 * w1f                                   # hidden: t = tanh(a1·x + c1)
    c1 = 0.5 * b1f                                   # h = 0.5*t + 0.5 (folded into layer 2)
    a2 = 0.25 * w2f                                  # output: y = 0.5*tanh(a2·t + c2) + 0.5
    c2 = 0.25 * jnp.sum(w2f, axis=1) + 0.5 * b2f

    # ---- lane-dense feature-major layout: (N, 2) -> (2, B, 128) ----
    pad_n = _round_up(n, 128)
    xt = x.T                                          # (2, N): one wrapper transpose pass
    if pad_n != n:
        xt = jnp.pad(xt, ((0, 0), (0, pad_n - n)))    # padded rows are sliced off below
    b_total = pad_n // 128
    x_fm = xt.reshape(2, b_total, 128)

    # ---- batch-tile sizing ----
    tile_b = min(int(tile_b), b_total, _MAX_TILE_B)
    # Prefer >= 8 grid steps (v7x megacore + pipelining) while each step still
    # streams >= ~1 MiB of HBM so per-step overhead stays amortized.
    split = max(8, _round_up(pl.cdiv(b_total, 8), 8))
    if split * 128 * 20 >= (1 << 20):
        tile_b = min(tile_b, split)
    if tile_b != b_total:
        tile_b = max(8, (tile_b // 8) * 8)            # (8,128) rule when not full-extent
    grid = (pl.cdiv(b_total, tile_b),)

    # Double-buffered in+out blocks; generous headroom for VMEM temporaries.
    io_bytes = 2 * (2 + f_out) * tile_b * 128 * 4
    vmem_limit = min(max(2 * io_bytes + (8 << 20), 16 << 20), 44 << 20)

    smem = pl.BlockSpec(memory_space=pltpu.MemorySpace.SMEM)  # tiny params, DMA'd once

    out_fm = pl.pallas_call(
        _mlp_kernel,
        out_shape=jax.ShapeDtypeStruct((f_out, b_total, 128), jnp.float32),
        grid=grid,
        in_specs=[
            pl.BlockSpec((2, tile_b, 128), lambda i: (0, i, 0)),  # batch-tiled input
            smem, smem, smem, smem,
        ],
        out_specs=pl.BlockSpec((f_out, tile_b, 128), lambda i: (0, i, 0)),
        compiler_params=pltpu.CompilerParams(
            dimension_semantics=("parallel",),        # shard batch tiles across v7x TCs
            vmem_limit_bytes=vmem_limit,
        ),
    )(x_fm, a1, c1, a2, c2)

    # Back to the module's row-major (N, 3) API.
    # TODO(synk): skip this transpose pass if the consumer accepts feature-major output.
    return out_fm.reshape(f_out, pad_n)[:, :n].T


def _reference(x, w1, b1, w2, b2):
    h1 = jax.nn.sigmoid(x @ w1.T + b1)
    return jax.nn.sigmoid(h1 @ w2.T + b2)


# TODO(synk): forward(X, return_z1=True) (also returning pre-activation z1) and the
# fit / conditioner_criterion / plot training utilities are outside the forward pass
# and are not implemented here.


if __name__ == "__main__":
    key = jax.random.PRNGKey(0)
    k_x, k_w1, k_b1, k_w2, k_b2 = jax.random.split(key, 5)

    # Small deterministic inputs / params (PyTorch-Linear-style uniform init).
    # N is not a multiple of 128 so the batch-padding path is exercised, and
    # tile_b=8 gives a 2-step pipelined grid.
    N = 2000
    x = jax.random.normal(k_x, (N, 2), jnp.float32)

    bound = 1.0 / jnp.sqrt(2.0)  # fan_in = 2 for both layers
    w1 = jax.random.uniform(k_w1, (2, 2), jnp.float32, -bound, bound)
    b1 = jax.random.uniform(k_b1, (2,), jnp.float32, -bound, bound)
    w2 = jax.random.uniform(k_w2, (3, 2), jnp.float32, -bound, bound)
    b2 = jax.random.uniform(k_b2, (3,), jnp.float32, -bound, bound)

    y = three_layer_perceptron(x, w1, b1, w2, b2, tile_b=8)
    y = jax.block_until_ready(y)

    y_ref = _reference(x, w1, b1, w2, b2)
    assert y.shape == (N, 3), y.shape
    assert jnp.allclose(y, y_ref, atol=1e-5), "mismatch vs pure-JAX reference"

    print("KERNEL_OK")
</pallas_src>

<mosaic_0001>
module attributes {stable_mosaic.version = 11 : i64} {
  func.func @_mlp_kernel(%arg0: i32, %arg1: memref<2x8x128xf32, #tpu.memory_space<vmem>>, %arg2: memref<2x2xf32, #tpu.memory_space<smem>>, %arg3: memref<2xf32, #tpu.memory_space<smem>>, %arg4: memref<3x2xf32, #tpu.memory_space<smem>>, %arg5: memref<3xf32, #tpu.memory_space<smem>>, %arg6: memref<3x8x128xf32, #tpu.memory_space<vmem>>) attributes {dimension_semantics = [#tpu.dimension_semantics<parallel>], iteration_bounds = array<i64: 2>, scalar_prefetch = 0 : i64, scratch_operands = 0 : i64, tpu.core_type = #tpu.core_type<tc>, window_params = [{transform_indices = @transform_0, window_bounds = array<i64: 2, 8, 128>}, {transform_indices = @transform_1, window_bounds = array<i64: 2, 2>}, {transform_indices = @transform_2, window_bounds = array<i64: 2>}, {transform_indices = @transform_3, window_bounds = array<i64: 3, 2>}, {transform_indices = @transform_4, window_bounds = array<i64: 3>}, {transform_indices = @transform_5, window_bounds = array<i64: 3, 8, 128>}]} {
    %c0 = arith.constant 0 : index
    %c0_0 = arith.constant 0 : index
    %c0_1 = arith.constant 0 : index
    %0 = vector.load %arg1[%c0, %c0_0, %c0_1] : memref<2x8x128xf32, #tpu.memory_space<vmem>>, vector<1x8x128xf32>
    %1 = vector.shape_cast %0 : vector<1x8x128xf32> to vector<8x128xf32>
    %c1 = arith.constant 1 : index
    %c0_2 = arith.constant 0 : index
    %c0_3 = arith.constant 0 : index
    %2 = vector.load %arg1[%c1, %c0_2, %c0_3] : memref<2x8x128xf32, #tpu.memory_space<vmem>>, vector<1x8x128xf32>
    %3 = vector.shape_cast %2 : vector<1x8x128xf32> to vector<8x128xf32>
    %c0_4 = arith.constant 0 : index
    %c0_5 = arith.constant 0 : index
    %4 = memref.load %arg2[%c0_4, %c0_5] : memref<2x2xf32, #tpu.memory_space<smem>>
    %5 = vector.broadcast %4 : f32 to vector<8x128xf32>
    %6 = arith.mulf %5, %1 : vector<8x128xf32>
    %c0_6 = arith.constant 0 : index
    %c1_7 = arith.constant 1 : index
    %7 = memref.load %arg2[%c0_6, %c1_7] : memref<2x2xf32, #tpu.memory_space<smem>>
    %8 = vector.broadcast %7 : f32 to vector<8x128xf32>
    %9 = arith.mulf %8, %3 : vector<8x128xf32>
    %10 = arith.addf %6, %9 : vector<8x128xf32>
    %c0_8 = arith.constant 0 : index
    %11 = memref.load %arg3[%c0_8] : memref<2xf32, #tpu.memory_space<smem>>
    %12 = vector.broadcast %11 : f32 to vector<8x128xf32>
    %13 = arith.addf %10, %12 : vector<8x128xf32>
    %14 = math.tanh %13 : vector<8x128xf32>
    %c1_9 = arith.constant 1 : index
    %c0_10 = arith.constant 0 : index
    %15 = memref.load %arg2[%c1_9, %c0_10] : memref<2x2xf32, #tpu.memory_space<smem>>
    %16 = vector.broadcast %15 : f32 to vector<8x128xf32>
    %17 = arith.mulf %16, %1 : vector<8x128xf32>
    %c1_11 = arith.constant 1 : index
    %c1_12 = arith.constant 1 : index
    %18 = memref.load %arg2[%c1_11, %c1_12] : memref<2x2xf32, #tpu.memory_space<smem>>
    %19 = vector.broadcast %18 : f32 to vector<8x128xf32>
    %20 = arith.mulf %19, %3 : vector<8x128xf32>
    %21 = arith.addf %17, %20 : vector<8x128xf32>
    %c1_13 = arith.constant 1 : index
    %22 = memref.load %arg3[%c1_13] : memref<2xf32, #tpu.memory_space<smem>>
    %23 = vector.broadcast %22 : f32 to vector<8x128xf32>
    %24 = arith.addf %21, %23 : vector<8x128xf32>
    %25 = math.tanh %24 : vector<8x128xf32>
    %c0_14 = arith.constant 0 : index
    %c0_15 = arith.constant 0 : index
    %26 = memref.load %arg4[%c0_14, %c0_15] : memref<3x2xf32, #tpu.memory_space<smem>>
    %27 = vector.broadcast %26 : f32 to vector<8x128xf32>
    %28 = arith.mulf %27, %14 : vector<8x128xf32>
    %c0_16 = arith.constant 0 : index
    %c1_17 = arith.constant 1 : index
    %29 = memref.load %arg4[%c0_16, %c1_17] : memref<3x2xf32, #tpu.memory_space<smem>>
    %30 = vector.broadcast %29 : f32 to vector<8x128xf32>
    %31 = arith.mulf %30, %25 : vector<8x128xf32>
    %32 = arith.addf %28, %31 : vector<8x128xf32>
    %c0_18 = arith.constant 0 : index
    %33 = memref.load %arg5[%c0_18] : memref<3xf32, #tpu.memory_space<smem>>
    %34 = vector.broadcast %33 : f32 to vector<8x128xf32>
    %35 = arith.addf %32, %34 : vector<8x128xf32>
    %36 = math.tanh %35 : vector<8x128xf32>
    %cst = arith.constant 5.000000e-01 : f32
    %37 = vector.broadcast %cst : f32 to vector<8x128xf32>
    %38 = arith.mulf %37, %36 : vector<8x128xf32>
    %cst_19 = arith.constant 5.000000e-01 : f32
    %39 = vector.broadcast %cst_19 : f32 to vector<8x128xf32>
    %40 = arith.addf %38, %39 : vector<8x128xf32>
    %c0_20 = arith.constant 0 : index
    %c0_21 = arith.constant 0 : index
    %c0_22 = arith.constant 0 : index
    %41 = vector.load %arg6[%c0_20, %c0_21, %c0_22] : memref<3x8x128xf32, #tpu.memory_space<vmem>>, vector<1x8x128xf32>
    %42 = vector.shape_cast %41 : vector<1x8x128xf32> to vector<8x128xf32>
    %43 = vector.shape_cast %40 : vector<8x128xf32> to vector<1x8x128xf32>
    tpu.vector_store %arg6[%c0_20, %c0_21, %c0_22], %43 {strides = array<i32>} : memref<3x8x128xf32, #tpu.memory_space<vmem>>, vector<1x8x128xf32>,
    %c1_23 = arith.constant 1 : index
    %c0_24 = arith.constant 0 : index
    %44 = memref.load %arg4[%c1_23, %c0_24] : memref<3x2xf32, #tpu.memory_space<smem>>
    %45 = vector.broadcast %44 : f32 to vector<8x128xf32>
    %46 = arith.mulf %45, %14 : vector<8x128xf32>
    %c1_25 = arith.constant 1 : index
    %c1_26 = arith.constant 1 : index
    %47 = memref.load %arg4[%c1_25, %c1_26] : memref<3x2xf32, #tpu.memory_space<smem>>
    %48 = vector.broadcast %47 : f32 to vector<8x128xf32>
    %49 = arith.mulf %48, %25 : vector<8x128xf32>
    %50 = arith.addf %46, %49 : vector<8x128xf32>
    %c1_27 = arith.constant 1 : index
    %51 = memref.load %arg5[%c1_27] : memref<3xf32, #tpu.memory_space<smem>>
    %52 = vector.broadcast %51 : f32 to vector<8x128xf32>
    %53 = arith.addf %50, %52 : vector<8x128xf32>
    %54 = math.tanh %53 : vector<8x128xf32>
    %cst_28 = arith.constant 5.000000e-01 : f32
    %55 = vector.broadcast %cst_28 : f32 to vector<8x128xf32>
    %56 = arith.mulf %55, %54 : vector<8x128xf32>
    %cst_29 = arith.constant 5.000000e-01 : f32
    %57 = vector.broadcast %cst_29 : f32 to vector<8x128xf32>
    %58 = arith.addf %56, %57 : vector<8x128xf32>
    %c1_30 = arith.constant 1 : index
    %c0_31 = arith.constant 0 : index
    %c0_32 = arith.constant 0 : index
    %59 = vector.load %arg6[%c1_30, %c0_31, %c0_32] : memref<3x8x128xf32, #tpu.memory_space<vmem>>, vector<1x8x128xf32>
    %60 = vector.shape_cast %59 : vector<1x8x128xf32> to vector<8x128xf32>
    %61 = vector.shape_cast %58 : vector<8x128xf32> to vector<1x8x128xf32>
    tpu.vector_store %arg6[%c1_30, %c0_31, %c0_32], %61 {strides = array<i32>} : memref<3x8x128xf32, #tpu.memory_space<vmem>>, vector<1x8x128xf32>,
    %c2 = arith.constant 2 : index
    %c0_33 = arith.constant 0 : index
    %62 = memref.load %arg4[%c2, %c0_33] : memref<3x2xf32, #tpu.memory_space<smem>>
    %63 = vector.broadcast %62 : f32 to vector<8x128xf32>
    %64 = arith.mulf %63, %14 : vector<8x128xf32>
    %c2_34 = arith.constant 2 : index
    %c1_35 = arith.constant 1 : index
    %65 = memref.load %arg4[%c2_34, %c1_35] : memref<3x2xf32, #tpu.memory_space<smem>>
    %66 = vector.broadcast %65 : f32 to vector<8x128xf32>
    %67 = arith.mulf %66, %25 : vector<8x128xf32>
    %68 = arith.addf %64, %67 : vector<8x128xf32>
    %c2_36 = arith.constant 2 : index
    %69 = memref.load %arg5[%c2_36] : memref<3xf32, #tpu.memory_space<smem>>
    %70 = vector.broadcast %69 : f32 to vector<8x128xf32>
    %71 = arith.addf %68, %70 : vector<8x128xf32>
    %72 = math.tanh %71 : vector<8x128xf32>
    %cst_37 = arith.constant 5.000000e-01 : f32
    %73 = vector.broadcast %cst_37 : f32 to vector<8x128xf32>
    %74 = arith.mulf %73, %72 : vector<8x128xf32>
    %cst_38 = arith.constant 5.000000e-01 : f32
    %75 = vector.broadcast %cst_38 : f32 to vector<8x128xf32>
    %76 = arith.addf %74, %75 : vector<8x128xf32>
    %c2_39 = arith.constant 2 : index
    %c0_40 = arith.constant 0 : index
    %c0_41 = arith.constant 0 : index
    %77 = vector.load %arg6[%c2_39, %c0_40, %c0_41] : memref<3x8x128xf32, #tpu.memory_space<vmem>>, vector<1x8x128xf32>
    %78 = vector.shape_cast %77 : vector<1x8x128xf32> to vector<8x128xf32>
    %79 = vector.shape_cast %76 : vector<8x128xf32> to vector<1x8x128xf32>
    tpu.vector_store %arg6[%c2_39, %c0_40, %c0_41], %79 {strides = array<i32>} : memref<3x8x128xf32, #tpu.memory_space<vmem>>, vector<1x8x128xf32>,
    return
  }
  func.func @transform_0(%arg0: i32) -> (i32, i32, i32) {
    %c0_i32 = arith.constant 0 : i32
    %c0_i32_0 = arith.constant 0 : i32
    %c0_i32_1 = arith.constant 0 : i32
    return %c0_i32, %arg0, %c0_i32_0 : i32, i32, i32
  }
  func.func @transform_1(%arg0: i32) -> (i32, i32) {
    %c0_i32 = arith.constant 0 : i32
    %c0_i32_0 = arith.constant 0 : i32
    %c0_i32_1 = arith.constant 0 : i32
    return %c0_i32, %c0_i32_0 : i32, i32
  }
  func.func @transform_2(%arg0: i32) -> i32 {
    %c0_i32 = arith.constant 0 : i32
    %c0_i32_0 = arith.constant 0 : i32
    return %c0_i32 : i32
  }
  func.func @transform_3(%arg0: i32) -> (i32, i32) {
    %c0_i32 = arith.constant 0 : i32
    %c0_i32_0 = arith.constant 0 : i32
    %c0_i32_1 = arith.constant 0 : i32
    return %c0_i32, %c0_i32_0 : i32, i32
  }
  func.func @transform_4(%arg0: i32) -> i32 {
    %c0_i32 = arith.constant 0 : i32
    %c0_i32_0 = arith.constant 0 : i32
    return %c0_i32 : i32
  }
  func.func @transform_5(%arg0: i32) -> (i32, i32, i32) {
    %c0_i32 = arith.constant 0 : i32
    %c0_i32_0 = arith.constant 0 : i32
    %c0_i32_1 = arith.constant 0 : i32
    return %c0_i32, %arg0, %c0_i32_0 : i32, i32, i32
  }
}

</mosaic_0001>

<llo_original>
// kernel: three_layer_perceptron.1
$region0: #{three_layer_perceptron.1}
  #allocation0 [shape = 'u32[]', space=smem, size = 0x4, offset = 0x4, fixed_abs, tag = 'smem constant byte address 0x4 - core index']
  #allocation1 [shape = 'u32[144,128]{1,0:T(1,128)}', space=vmem, size = 0x12000, scoped, tag = 'internal scratch']
  %s0 = inlined_call_operand.vmem [shape: f32[2,16,128], index: 0, kind: input, shape index: {}]
  %s1 = inlined_call_operand.vmem [shape: f32[2,2], index: 1, kind: input, shape index: {}]
  %s2 = inlined_call_operand.vmem [shape: f32[2], index: 2, kind: input, shape index: {}]
  %s3 = inlined_call_operand.vmem [shape: f32[3,2], index: 3, kind: input, shape index: {}]
  %s4 = inlined_call_operand.vmem [shape: f32[3], index: 4, kind: input, shape index: {}]
  %s5 = inlined_call_operand.vmem [shape: f32[3,16,128], index: 5, kind: output, shape index: {}]
  %s6 = sld [smem:[#allocation0]]
  $region141: #{three_layer_perceptron.1} parent=0
    _
  %s8 = ssub.s32 1, %s6
  %s9 = scalar_select 0, %s8, %s6
  $region1: #{three_layer_perceptron.1} parent=0
    #allocation2 [shape = 'u8[16384]{0}', space=vmem, size = 0x4000, scoped, tag = 'input window, operand 0']
    #allocation3 [shape = 'u8[1024]{0}', space=smem, size = 0x400, scoped, tag = 'input window, operand 1, single buffered']
    #allocation4 [shape = 's32[2]{0}', space=sflag, size = 0x8, scoped, tag = 'scoped memory for three_layer_perceptron.1']
    #allocation5 [shape = 'u8[512]{0}', space=smem, size = 0x200, scoped, tag = 'input window, operand 2, single buffered']
    #allocation6 [shape = 's32[1]{0}', space=sflag, size = 0x4, scoped, tag = 'scoped memory for three_layer_perceptron.1']
    #allocation7 [shape = 'u8[2048]{0}', space=smem, size = 0x800, scoped, tag = 'input window, operand 3, single buffered']
    #allocation8 [shape = 'u8[512]{0}', space=smem, size = 0x200, scoped, tag = 'input window, operand 4, single buffered']
    #allocation9 [shape = 's32[1]{0}', space=sflag, size = 0x4, scoped, tag = 'scoped memory for three_layer_perceptron.1']
    #allocation10 [shape = 'u8[24576]{0}', space=vmem, size = 0x6000, scoped, tag = 'output window, operand 0']
    %10 = vsyncpa [#allocation4], 0
    %11 = vsyncpa [#allocation6], 0
    %12 = vsyncpa [#allocation9], 0
    loop: start=0, step=1, limit=4
    $region2: #{three_layer_perceptron.1} parent=1 // loop_pre_header
      _
    $region3: #{three_layer_perceptron.1} parent=1 // loop_header
      %s14 = sphi 0, %s18
      %p15 = scmp.ge.s32.totalorder %s14, 4
      %s24 = sphi 0, %s26
      %s27 = sphi 0, %s24
      %s28 = sphi 0, %s27
      %s44 = sphi 0, %s28
      %s48 = sphi 0, %s48
      %s50 = sphi 0, %s48
      %s51 = sphi 0, %s50
      %s65 = sphi 0, %s51
      %s69 = sphi 0, %s69
      %s71 = sphi 0, %s69
      %s72 = sphi 0, %s71
      %s86 = sphi 0, %s72
      %s90 = sphi 0, %s90
      %s92 = sphi 0, %s90
      %s93 = sphi 0, %s92
      %s107 = sphi 0, %s93
      %s111 = sphi 0, %s111
      %s113 = sphi 0, %s111
      %s114 = sphi 0, %s113
      %s128 = sphi 0, %s114
      %s134 = sphi 0, %s136
      %s137 = sphi 0, %s134
      %s138 = sphi 0, %s137
      %s154 = sphi 0, %s138
    $region4: #{three_layer_perceptron.1} parent=1 // loop_header_branch
      %17 = sbr.rel (%p15) target = $region8
    $region5: #{three_layer_perceptron.1} parent=1 // loop_body
      %s19 = ssub.s32 %s14, 1
      %s20 = ssub.s32 %s14, 2
      %s21 = sadd.s32 %s14, 1
      %s22 = ssub.s32 %s14, %s21
      %p23 = scmp.eq.s32.totalorder %s22, 0
      %s25 = sadd.s32 %s24, 1
      %s26 = scalar_select %p23, %s24, %s25
      %p29 = pneg %p23
      %p30 = scmp.eq.s32.totalorder %s14, 1
      %p31 = por %p29, %p30
      %p32 = scmp.ne.s32.totalorder %s24, %s27
      %p33 = scmp.eq.s32.totalorder %s14, 0
      %p34 = por %p32, %p33
      %p35 = scmp.ne.s32.totalorder %s24, %s27
      %p36 = scmp.eq.s32.totalorder %s19, 1
      %p37 = por %p35, %p36
      %p38 = scmp.ne.s32.totalorder %s27, %s28
      %p39 = scmp.eq.s32.totalorder %s19, 0
      %p40 = por %p38, %p39
      %p41 = scmp.ne.s32.totalorder %s27, %s28
      %p42 = scmp.eq.s32.totalorder %s20, 1
      %p43 = por %p41, %p42
      %p45 = scmp.ne.s32.totalorder %s28, %s44
      %p46 = scmp.eq.s32.totalorder %s20, 0
      %p47 = por %p45, %p46
      %s49 = sadd.s32 %s48, 1
      %p52 = scmp.eq.s32.totalorder %s14, 1
      %p53 = scmp.ne.s32.totalorder %s48, %s50
      %p54 = scmp.eq.s32.totalorder %s14, 0
      %p55 = por %p53, %p54
      %p56 = scmp.ne.s32.totalorder %s48, %s50
      %p57 = scmp.eq.s32.totalorder %s19, 1
      %p58 = por %p56, %p57
      %p59 = scmp.ne.s32.totalorder %s50, %s51
      %p60 = scmp.eq.s32.totalorder %s19, 0
      %p61 = por %p59, %p60
      %p62 = scmp.ne.s32.totalorder %s50, %s51
      %p63 = scmp.eq.s32.totalorder %s20, 1
      %p64 = por %p62, %p63
      %p66 = scmp.ne.s32.totalorder %s51, %s65
      %p67 = scmp.eq.s32.totalorder %s20, 0
      %p68 = por %p66, %p67
      %s70 = sadd.s32 %s69, 1
      %p73 = scmp.eq.s32.totalorder %s14, 1
      %p74 = scmp.ne.s32.totalorder %s69, %s71
      %p75 = scmp.eq.s32.totalorder %s14, 0
      %p76 = por %p74, %p75
      %p77 = scmp.ne.s32.totalorder %s69, %s71
      %p78 = scmp.eq.s32.totalorder %s19, 1
      %p79 = por %p77, %p78
      %p80 = scmp.ne.s32.totalorder %s71, %s72
      %p81 = scmp.eq.s32.totalorder %s19, 0
      %p82 = por %p80, %p81
      %p83 = scmp.ne.s32.totalorder %s71, %s72
      %p84 = scmp.eq.s32.totalorder %s20, 1
      %p85 = por %p83, %p84
      %p87 = scmp.ne.s32.totalorder %s72, %s86
      %p88 = scmp.eq.s32.totalorder %s20, 0
      %p89 = por %p87, %p88
      %s91 = sadd.s32 %s90, 1
      %p94 = scmp.eq.s32.totalorder %s14, 1
      %p95 = scmp.ne.s32.totalorder %s90, %s92
      %p96 = scmp.eq.s32.totalorder %s14, 0
      %p97 = por %p95, %p96
      %p98 = scmp.ne.s32.totalorder %s90, %s92
      %p99 = scmp.eq.s32.totalorder %s19, 1
      %p100 = por %p98, %p99
      %p101 = scmp.ne.s32.totalorder %s92, %s93
      %p102 = scmp.eq.s32.totalorder %s19, 0
      %p103 = por %p101, %p102
      %p104 = scmp.ne.s32.totalorder %s92, %s93
      %p105 = scmp.eq.s32.totalorder %s20, 1
      %p106 = por %p104, %p105
      %p108 = scmp.ne.s32.totalorder %s93, %s107
      %p109 = scmp.eq.s32.totalorder %s20, 0
      %p110 = por %p108, %p109
      %s112 = sadd.s32 %s111, 1
      %p115 = scmp.eq.s32.totalorder %s14, 1
      %p116 = scmp.ne.s32.totalorder %s111, %s113
      %p117 = scmp.eq.s32.totalorder %s14, 0
      %p118 = por %p116, %p117
      %p119 = scmp.ne.s32.totalorder %s111, %s113
      %p120 = scmp.eq.s32.totalorder %s19, 1
      %p121 = por %p119, %p120
      %p122 = scmp.ne.s32.totalorder %s113, %s114
      %p123 = scmp.eq.s32.totalorder %s19, 0
      %p124 = por %p122, %p123
      %p125 = scmp.ne.s32.totalorder %s113, %s114
      %p126 = scmp.eq.s32.totalorder %s20, 1
      %p127 = por %p125, %p126
      %p129 = scmp.ne.s32.totalorder %s114, %s128
      %p130 = scmp.eq.s32.totalorder %s20, 0
      %p131 = por %p129, %p130
      %s132 = ssub.s32 %s14, %s21
      %p133 = scmp.eq.s32.totalorder %s132, 0
      %s135 = sadd.s32 %s134, 1
      %s136 = scalar_select %p133, %s134, %s135
      %p139 = pneg %p133
      %p140 = scmp.eq.s32.totalorder %s14, 1
      %p141 = por %p139, %p140
      %p142 = scmp.ne.s32.totalorder %s134, %s137
      %p143 = scmp.eq.s32.totalorder %s14, 0
      %p144 = por %p142, %p143
      %p145 = scmp.ne.s32.totalorder %s134, %s137
      %p146 = scmp.eq.s32.totalorder %s19, 1
      %p147 = por %p145, %p146
      %p148 = scmp.ne.s32.totalorder %s137, %s138
      %p149 = scmp.eq.s32.totalorder %s19, 0
      %p150 = por %p148, %p149
      %p151 = scmp.ne.s32.totalorder %s137, %s138
      %p152 = scmp.eq.s32.totalorder %s20, 1
      %p153 = por %p151, %p152
      %p155 = scmp.ne.s32.totalorder %s138, %s154
      %p156 = scmp.eq.s32.totalorder %s20, 0
      %p157 = por %p155, %p156
      %p158 = scmp.le.s32.totalorder 1, %s14
      %p159 = scmp.lt.s32.totalorder %s14, 3
      %p160 = pnand %p158, %p159
      %p161 = pneg %p160
      // Predicated region
      $region9: #{three_layer_perceptron.1} parent=5 // pred_check
        _
      $region10: #{three_layer_perceptron.1} parent=5 // pred_check_branch
        %163 = sbr.rel (%p160) target = $region12
      $region11: #{three_layer_perceptron.1} parent=5 // pred_region
        %s164 = ssub.s32 %s14, 1
        // Predicated region
        $region13: #{three_layer_perceptron.1} parent=11 // pred_check
          %p165 = pneg %p61
        $region14: #{three_layer_perceptron.1} parent=11 // pred_check_branch
          %167 = sbr.rel (%p165) target = $region16
        $region15: #{three_layer_perceptron.1} parent=11 // pred_region
          %s169 = ssub.s32 32, 32
          %170 = vsyncadd [#allocation4], %s169
          %s172 = sshll.u32 %s1, 4
          %s173 = int_to_ptr.vmem [resolvable:$true] %s172
          %175 = dma.vmem_to_smem %s173, 32, [#allocation3], [#allocation4]
        $region16: #{three_layer_perceptron.1} parent=11 // pred_fallthru
          _
        // Predicated region
        $region17: #{three_layer_perceptron.1} parent=11 // pred_check
          %p176 = pneg %p82
        $region18: #{three_layer_perceptron.1} parent=11 // pred_check_branch
          %178 = sbr.rel (%p176) target = $region20
        $region19: #{three_layer_perceptron.1} parent=11 // pred_region
          %s180 = ssub.s32 16, 16
          %181 = vsyncadd [#allocation6], %s180
          %s183 = sshll.u32 %s2, 4
          %s184 = int_to_ptr.vmem [resolvable:$true] %s183
          %186 = dma.vmem_to_smem %s184, 16, [#allocation5], [#allocation6]
        $region20: #{three_layer_perceptron.1} parent=11 // pred_fallthru
          _
        // Predicated region
        $region21: #{three_layer_perceptron.1} parent=11 // pred_check
          %p187 = pneg %p103
        $region22: #{three_layer_perceptron.1} parent=11 // pred_check_branch
          %189 = sbr.rel (%p187) target = $region24
        $region23: #{three_layer_perceptron.1} parent=11 // pred_region
          %s191 = ssub.s32 64, 64
          %192 = vsyncadd [#allocation6], %s191
          %s194 = sshll.u32 %s3, 4
          %s195 = int_to_ptr.vmem [resolvable:$true] %s194
          %197 = dma.vmem_to_smem %s195, 64, [#allocation7], [#allocation6]
        $region24: #{three_layer_perceptron.1} parent=11 // pred_fallthru
          _
        // Predicated region
        $region25: #{three_layer_perceptron.1} parent=11 // pred_check
          %p198 = pneg %p124
        $region26: #{three_layer_perceptron.1} parent=11 // pred_check_branch
          %200 = sbr.rel (%p198) target = $region28
        $region27: #{three_layer_perceptron.1} parent=11 // pred_region
          %s202 = ssub.s32 16, 16
          %203 = vsyncadd [#allocation9], %s202
          %s205 = sshll.u32 %s4, 4
          %s206 = int_to_ptr.vmem [resolvable:$true] %s205
          %208 = dma.vmem_to_smem %s206, 16, [#allocation8], [#allocation9]
        $region28: #{three_layer_perceptron.1} parent=11 // pred_fallthru
          _
      $region12: #{three_layer_perceptron.1} parent=5 // pred_fallthru
        _
      %p209 = scmp.lt.s32.totalorder %s14, 2
      // Predicated region
      $region29: #{three_layer_perceptron.1} parent=5 // pred_check
        %p210 = pneg %p209
      $region30: #{three_layer_perceptron.1} parent=5 // pred_check_branch
        %212 = sbr.rel (%p210) target = $region32
      $region31: #{three_layer_perceptron.1} parent=5 // pred_region
        // Predicated region
        $region33: #{three_layer_perceptron.1} parent=31 // pred_check
          %p213 = pneg %p34
        $region34: #{three_layer_perceptron.1} parent=31 // pred_check_branch
          %215 = sbr.rel (%p213) target = $region36
        $region35: #{three_layer_perceptron.1} parent=31 // pred_region
          %s216 = sand.u32 %s24, 1
          %s217 = sand.u32 %s24, 1
          %s218 = smul.addr %s217, 16
          %s219 = scalar_lea.vmem [#allocation2], %s218
          %s220 = smul.addr %s14, 8
          %s221 = scalar_lea.vmem %s0, %s220
          // Predicated region
          $region37: #{three_layer_perceptron.1} parent=35 // pred_check
            _
          $region38: #{three_layer_perceptron.1} parent=35 // pred_check_branch
            %223 = sbr.rel (0) target = $region40
          $region39: #{three_layer_perceptron.1} parent=35 // pred_region
            // Predicated region
            $region41: #{three_layer_perceptron.1} parent=39 // pred_check
              _
            $region42: #{three_layer_perceptron.1} parent=39 // pred_check_branch
              %225 = sbr.rel (0) target = $region44
            $region43: #{three_layer_perceptron.1} parent=39 // pred_region
              // Predicated region
              $region56: #{three_layer_perceptron.1} parent=43 // pred_check
                _
              $region57: #{three_layer_perceptron.1} parent=43 // pred_check_branch
                %242 = sbr.rel (0) target = $region59
              $region58: #{three_layer_perceptron.1} parent=43 // pred_region
                loop: start=0, step=1, limit=1
                $region60: #{three_layer_perceptron.1} parent=58 // loop_pre_header
                  _
                $region61: #{three_layer_perceptron.1} parent=58 // loop_header
                  %s244 = sphi 0, %s248
                  %p245 = scmp.ge.s32.totalorder %s244, 1
                  %s249 = sphi %s221, %s221
                  %s250 = sphi %s219, %s219
                $region62: #{three_layer_perceptron.1} parent=58 // loop_header_branch
                  %247 = sbr.rel (%p245) target = $region66
                $region63: #{three_layer_perceptron.1} parent=58 // loop_body
                  %v251 = vld [vmem:[%s249] sm:$0xff]
                  %252 = vst [vmem:[%s250] sm:$0xff] %v251
                  %v253 = vld [vmem:[%s249 + $0x10] sm:$0xff]
                  %254 = vst [vmem:[%s250 + $0x8] sm:$0xff] %v253
                $region64: #{three_layer_perceptron.1} parent=58 // loop_footer
                  %s248 = sadd.s32 1, %s244
                $region65: #{three_layer_perceptron.1} parent=58 // loop_footer_branch
                  %243 = sbr.rel target = $region61
                $region66: #{three_layer_perceptron.1} parent=58 // loop_exit
                  _
              $region59: #{three_layer_perceptron.1} parent=43 // pred_fallthru
                _
              // Predicated region
              $region67: #{three_layer_perceptron.1} parent=43 // pred_check
                _
              $region68: #{three_layer_perceptron.1} parent=43 // pred_check_branch
                %256 = sbr.rel target = $region70
              $region69: #{three_layer_perceptron.1} parent=43 // pred_region
                _
              $region70: #{three_layer_perceptron.1} parent=43 // pred_fallthru
                _
            $region44: #{three_layer_perceptron.1} parent=39 // pred_fallthru
              _
            // Predicated region
            $region45: #{three_layer_perceptron.1} parent=39 // pred_check
              _
            $region46: #{three_layer_perceptron.1} parent=39 // pred_check_branch
              %227 = sbr.rel target = $region48
            $region47: #{three_layer_perceptron.1} parent=39 // pred_region
              loop: start=0, step=1, limit=1
              $region49: #{three_layer_perceptron.1} parent=47 // loop_pre_header
                _
              $region50: #{three_layer_perceptron.1} parent=47 // loop_header
                %s230 = sphi 0, %s234
                %p231 = scmp.ge.s32.totalorder %s230, 1
                %s235 = sphi %s221, %s221
                %s236 = sphi %s219, %s219
              $region51: #{three_layer_perceptron.1} parent=47 // loop_header_branch
                %233 = sbr.rel (%p231) target = $region55
              $region52: #{three_layer_perceptron.1} parent=47 // loop_body
                %v237 = vld [vmem:[%s235] sm:$0xff]
                %238 = vst [vmem:[%s236] sm:$0xff] %v237
                %v239 = vld [vmem:[%s235 + $0x10] sm:$0xff]
                %240 = vst [vmem:[%s236 + $0x8] sm:$0xff] %v239
              $region53: #{three_layer_perceptron.1} parent=47 // loop_footer
                %s234 = sadd.s32 1, %s230
              $region54: #{three_layer_perceptron.1} parent=47 // loop_footer_branch
                %229 = sbr.rel target = $region50
              $region55: #{three_layer_perceptron.1} parent=47 // loop_exit
                _
            $region48: #{three_layer_perceptron.1} parent=39 // pred_fallthru
              _
          $region40: #{three_layer_perceptron.1} parent=35 // pred_fallthru
            _
          %257 = vnop
        $region36: #{three_layer_perceptron.1} parent=31 // pred_fallthru
          _
      $region32: #{three_layer_perceptron.1} parent=5 // pred_fallthru
        _
      %p258 = scmp.le.s32.totalorder 1, %s14
      %p259 = scmp.lt.s32.totalorder %s14, 3
      %p260 = pnand %p258, %p259
      %p261 = pneg %p260
      // Predicated region
      $region71: #{three_layer_perceptron.1} parent=5 // pred_check
        _
      $region72: #{three_layer_perceptron.1} parent=5 // pred_check_branch
        %263 = sbr.rel (%p260) target = $region74
      $region73: #{three_layer_perceptron.1} parent=5 // pred_region
        %s264 = ssub.s32 %s14, 1
        %s265 = sand.u32 %s27, 1
        %s266 = sand.u32 %s27, 1
        %s267 = smul.addr %s266, 16
        %s268 = scalar_lea.vmem [#allocation2], %s267
        // Predicated region
        $region75: #{three_layer_perceptron.1} parent=73 // pred_check
          %p269 = pneg %p40
        $region76: #{three_layer_perceptron.1} parent=73 // pred_check_branch
          %271 = sbr.rel (%p269) target = $region78
        $region77: #{three_layer_perceptron.1} parent=73 // pred_region
          _
        $region78: #{three_layer_perceptron.1} parent=73 // pred_fallthru
          _
        // Predicated region
        $region79: #{three_layer_perceptron.1} parent=73 // pred_check
          %p272 = pneg %p61
        $region80: #{three_layer_perceptron.1} parent=73 // pred_check_branch
          %274 = sbr.rel (%p272) target = $region82
        $region81: #{three_layer_perceptron.1} parent=73 // pred_region
          %275 = dma.done [#allocation4], 32
        $region82: #{three_layer_perceptron.1} parent=73 // pred_fallthru
          _
        // Predicated region
        $region83: #{three_layer_perceptron.1} parent=73 // pred_check
          %p276 = pneg %p82
        $region84: #{three_layer_perceptron.1} parent=73 // pred_check_branch
          %278 = sbr.rel (%p276) target = $region86
        $region85: #{three_layer_perceptron.1} parent=73 // pred_region
          %279 = dma.done [#allocation6], 16
        $region86: #{three_layer_perceptron.1} parent=73 // pred_fallthru
          _
        // Predicated region
        $region87: #{three_layer_perceptron.1} parent=73 // pred_check
          %p280 = pneg %p103
        $region88: #{three_layer_perceptron.1} parent=73 // pred_check_branch
          %282 = sbr.rel (%p280) target = $region90
        $region89: #{three_layer_perceptron.1} parent=73 // pred_region
          %283 = dma.done [#allocation6], 64
        $region90: #{three_layer_perceptron.1} parent=73 // pred_fallthru
          _
        // Predicated region
        $region91: #{three_layer_perceptron.1} parent=73 // pred_check
          %p284 = pneg %p124
        $region92: #{three_layer_perceptron.1} parent=73 // pred_check_branch
          %286 = sbr.rel (%p284) target = $region94
        $region93: #{three_layer_perceptron.1} parent=73 // pred_region
          %287 = dma.done [#allocation9], 16
        $region94: #{three_layer_perceptron.1} parent=73 // pred_fallthru
          _
        %288 = sfence
        %s289 = sand.u32 %s27, 1
        %s290 = sand.u32 %s27, 1
        %s291 = smul.addr %s290, 16
        %s292 = scalar_lea.vmem [#allocation2], %s291
        %p293 = pneg %p40
        %p294 = pneg %p37
        %p295 = pneg %p61
        %p296 = pneg %p58
        %p297 = pneg %p82
        %p298 = pneg %p79
        %p299 = pneg %p103
        %p300 = pneg %p100
        %p301 = pneg %p124
        %p302 = pneg %p121
        %p303 = pneg %p150
        %p304 = pneg %p147
        %s305 = sand.u32 %s137, 1
        %s306 = sand.u32 %s137, 1
        %s307 = smul.addr %s306, 24
        %s308 = scalar_lea.vmem [#allocation10], %s307
        %v309 = vld [vmem:[%s268] sm:$0xff]
        %s310 = scalar_lea.vmem %s268, 8 [#allocation2]
        %v311 = vld [vmem:[%s310] sm:$0xff]
        %s312 = sld [smem:[#allocation3]]
        %v313 = vstv %s312
        %v314 = vmul.f32 %v313, %v309
        %s315 = sld [smem:[#allocation3 + $0x1]]
        %v316 = vstv %s315
        %v317 = vmul.f32 %v316, %v311
        %v318 = vadd.f32 %v314, %v317
        %s319 = sld [smem:[#allocation5]]
        %v320 = vstv %s319
        %v321 = vadd.f32 %v318, %v320
        %v322 = vtanh.pop %v321
        %s323 = sld [smem:[#allocation3 + $0x80]]
        %v324 = vstv %s323
        %v325 = vmul.f32 %v324, %v309
        %s326 = sld [smem:[#allocation3 + $0x81]]
        %v327 = vstv %s326
        %v328 = vmul.f32 %v327, %v311
        %v329 = vadd.f32 %v325, %v328
        %s330 = sld [smem:[#allocation5 + $0x1]]
        %v331 = vstv %s330
        %v332 = vadd.f32 %v329, %v331
        %v333 = vtanh.pop %v332
        %s334 = sld [smem:[#allocation7]]
        %v335 = vstv %s334
        %v336 = vmul.f32 %v335, %v322
        %s337 = sld [smem:[#allocation7 + $0x1]]
        %v338 = vstv %s337
        %v339 = vmul.f32 %v338, %v333
        %v340 = vadd.f32 %v336, %v339
        %s341 = sld [smem:[#allocation8]]
        %v342 = vstv %s341
        %v343 = vadd.f32 %v340, %v342
        %v344 = vtanh.pop %v343
        %v345 = vmul.f32 %v344, 0.5
        %v346 = vadd.f32 %v345, 0.5
        %347 = vst [vmem:[%s308] sm:$0xff] %v346
        %s348 = sld [smem:[#allocation7 + $0x80]]
        %v349 = vstv %s348
        %v350 = vmul.f32 %v349, %v322
        %s351 = sld [smem:[#allocation7 + $0x81]]
        %v352 = vstv %s351
        %v353 = vmul.f32 %v352, %v333
        %v354 = vadd.f32 %v350, %v353
        %s355 = sld [smem:[#allocation8 + $0x1]]
        %v356 = vstv %s355
        %v357 = vadd.f32 %v354, %v356
        %v358 = vtanh.pop %v357
        %v359 = vmul.f32 %v358, 0.5
        %v360 = vadd.f32 %v359, 0.5
        %s361 = scalar_lea.vmem %s308, 8 [#allocation10]
        %362 = vst [vmem:[%s361] sm:$0xff] %v360
        %s363 = sld [smem:[#allocation7 + $0x100]]
        %v364 = vstv %s363
        %v365 = vmul.f32 %v364, %v322
        %s366 = sld [smem:[#allocation7 + $0x101]]
        %v367 = vstv %s366
        %v368 = vmul.f32 %v367, %v333
        %v369 = vadd.f32 %v365, %v368
        %s370 = sld [smem:[#allocation8 + $0x2]]
        %v371 = vstv %s370
        %v372 = vadd.f32 %v369, %v371
        %v373 = vtanh.pop %v372
        %v374 = vmul.f32 %v373, 0.5
        %v375 = vadd.f32 %v374, 0.5
        %s376 = scalar_lea.vmem %s308, 16 [#allocation10]
        %377 = vst [vmem:[%s376] sm:$0xff] %v375
        %s378 = sand.u32 %s137, 1
        %s379 = sand.u32 %s137, 1
        %s380 = smul.addr %s379, 24
        %s381 = scalar_lea.vmem [#allocation10], %s380
        // Predicated region
        $region95: #{three_layer_perceptron.1} parent=73 // pred_check
          %p382 = pneg %p147
        $region96: #{three_layer_perceptron.1} parent=73 // pred_check_branch
          %384 = sbr.rel (%p382) target = $region98
        $region97: #{three_layer_perceptron.1} parent=73 // pred_region
          %s385 = smul.addr %s19, 8
          %s386 = scalar_lea.vmem %s5, %s385
          // Predicated region
          $region99: #{three_layer_perceptron.1} parent=97 // pred_check
            _
          $region100: #{three_layer_perceptron.1} parent=97 // pred_check_branch
            %388 = sbr.rel (0) target = $region102
          $region101: #{three_layer_perceptron.1} parent=97 // pred_region
            // Predicated region
            $region103: #{three_layer_perceptron.1} parent=101 // pred_check
              _
            $region104: #{three_layer_perceptron.1} parent=101 // pred_check_branch
              %390 = sbr.rel (0) target = $region106
            $region105: #{three_layer_perceptron.1} parent=101 // pred_region
              // Predicated region
              $region118: #{three_layer_perceptron.1} parent=105 // pred_check
                _
              $region119: #{three_layer_perceptron.1} parent=105 // pred_check_branch
                %409 = sbr.rel (0) target = $region121
              $region120: #{three_layer_perceptron.1} parent=105 // pred_region
                loop: start=0, step=1, limit=1
                $region122: #{three_layer_perceptron.1} parent=120 // loop_pre_header
                  _
                $region123: #{three_layer_perceptron.1} parent=120 // loop_header
                  %s411 = sphi 0, %s415
                  %p412 = scmp.ge.s32.totalorder %s411, 1
                  %s416 = sphi %s381, %s381
                  %s417 = sphi %s386, %s386
                $region124: #{three_layer_perceptron.1} parent=120 // loop_header_branch
                  %414 = sbr.rel (%p412) target = $region128
                $region125: #{three_layer_perceptron.1} parent=120 // loop_body
                  %v418 = vld [vmem:[%s416] sm:$0xff]
                  %419 = vst [vmem:[%s417] sm:$0xff] %v418
                  %v420 = vld [vmem:[%s416 + $0x8] sm:$0xff]
                  %421 = vst [vmem:[%s417 + $0x10] sm:$0xff] %v420
                  %v422 = vld [vmem:[%s416 + $0x10] sm:$0xff]
                  %423 = vst [vmem:[%s417 + $0x20] sm:$0xff] %v422
                $region126: #{three_layer_perceptron.1} parent=120 // loop_footer
                  %s415 = sadd.s32 1, %s411
                $region127: #{three_layer_perceptron.1} parent=120 // loop_footer_branch
                  %410 = sbr.rel target = $region123
                $region128: #{three_layer_perceptron.1} parent=120 // loop_exit
                  _
              $region121: #{three_layer_perceptron.1} parent=105 // pred_fallthru
                _
              // Predicated region
              $region129: #{three_layer_perceptron.1} parent=105 // pred_check
                _
              $region130: #{three_layer_perceptron.1} parent=105 // pred_check_branch
                %425 = sbr.rel target = $region132
              $region131: #{three_layer_perceptron.1} parent=105 // pred_region
                _
              $region132: #{three_layer_perceptron.1} parent=105 // pred_fallthru
                _
            $region106: #{three_layer_perceptron.1} parent=101 // pred_fallthru
              _
            // Predicated region
            $region107: #{three_layer_perceptron.1} parent=101 // pred_check
              _
            $region108: #{three_layer_perceptron.1} parent=101 // pred_check_branch
              %392 = sbr.rel target = $region110
            $region109: #{three_layer_perceptron.1} parent=101 // pred_region
              loop: start=0, step=1, limit=1
              $region111: #{three_layer_perceptron.1} parent=109 // loop_pre_header
                _
              $region112: #{three_layer_perceptron.1} parent=109 // loop_header
                %s395 = sphi 0, %s399
                %p396 = scmp.ge.s32.totalorder %s395, 1
                %s400 = sphi %s381, %s381
                %s401 = sphi %s386, %s386
              $region113: #{three_layer_perceptron.1} parent=109 // loop_header_branch
                %398 = sbr.rel (%p396) target = $region117
              $region114: #{three_layer_perceptron.1} parent=109 // loop_body
                %v402 = vld [vmem:[%s400] sm:$0xff]
                %403 = vst [vmem:[%s401] sm:$0xff] %v402
                %v404 = vld [vmem:[%s400 + $0x8] sm:$0xff]
                %405 = vst [vmem:[%s401 + $0x10] sm:$0xff] %v404
                %v406 = vld [vmem:[%s400 + $0x10] sm:$0xff]
                %407 = vst [vmem:[%s401 + $0x20] sm:$0xff] %v406
              $region115: #{three_layer_perceptron.1} parent=109 // loop_footer
                %s399 = sadd.s32 1, %s395
              $region116: #{three_layer_perceptron.1} parent=109 // loop_footer_branch
                %394 = sbr.rel target = $region112
              $region117: #{three_layer_perceptron.1} parent=109 // loop_exit
                _
            $region110: #{three_layer_perceptron.1} parent=101 // pred_fallthru
              _
          $region102: #{three_layer_perceptron.1} parent=97 // pred_fallthru
            _
          %426 = vnop
        $region98: #{three_layer_perceptron.1} parent=73 // pred_fallthru
          _
      $region74: #{three_layer_perceptron.1} parent=5 // pred_fallthru
        _
      %p427 = scmp.le.s32.totalorder 2, %s14
      // Predicated region
      $region133: #{three_layer_perceptron.1} parent=5 // pred_check
        %p428 = pneg %p427
      $region134: #{three_layer_perceptron.1} parent=5 // pred_check_branch
        %430 = sbr.rel (%p428) target = $region136
      $region135: #{three_layer_perceptron.1} parent=5 // pred_region
        %s431 = ssub.s32 %s14, 2
        // Predicated region
        $region137: #{three_layer_perceptron.1} parent=135 // pred_check
          %p432 = pneg %p153
        $region138: #{three_layer_perceptron.1} parent=135 // pred_check_branch
          %434 = sbr.rel (%p432) target = $region140
        $region139: #{three_layer_perceptron.1} parent=135 // pred_region
          %s435 = sand.u32 %s138, 1
          %s436 = sand.u32 %s138, 1
          %s437 = smul.addr %s436, 24
          %s438 = scalar_lea.vmem [#allocation10], %s437
        $region140: #{three_layer_perceptron.1} parent=135 // pred_fallthru
          _
      $region136: #{three_layer_perceptron.1} parent=5 // pred_fallthru
        _
    $region6: #{three_layer_perceptron.1} parent=1 // loop_footer
      %s18 = sadd.s32 1, %s14
    $region7: #{three_layer_perceptron.1} parent=1 // loop_footer_branch
      %13 = sbr.rel target = $region3
    $region8: #{three_layer_perceptron.1} parent=1 // loop_exit
      _
    %439 = vsyncpa [#allocation4], 1
    %s440 = scalar_lea.sflag [#allocation4], 1
    %441 = vsyncpa %s440, 1
    %442 = vsyncpa [#allocation6], 1
    %443 = vsyncpa [#allocation9], 1

</llo_original>
